<compile_context>
chip_gen: v7x
topology: tpu7x:2x2x1
jax: 0.10.0
libtpu: 0.0.40
codegen_flags: <defaults>
</compile_context>

<pallas_src>
import numpy as np
import jax
import jax.numpy as jnp
from jax.experimental import pallas as pl
from jax.experimental.pallas import tpu as pltpu


# ----------------------------------------------------------------------------
# MADE mask construction (numpy, deterministic: left-to-right / equal degrees)
# ----------------------------------------------------------------------------
def create_degrees(input_size, hidden_units):
    degrees = [np.arange(1, input_size + 1)]
    for units in hidden_units:
        min_degree = min(int(np.min(degrees[-1])), input_size - 1)
        degrees.append(
            np.maximum(
                min_degree,
                np.ceil(
                    np.arange(1, units + 1) * (input_size - 1) / float(units + 1)
                ).astype(np.int32),
            )
        )
    return degrees


def create_masks(degrees):
    masks = [
        (inp[:, np.newaxis] <= out).astype(np.float32)
        for inp, out in zip(degrees[:-1], degrees[1:])
    ]
    masks.append((degrees[-1][:, np.newaxis] < degrees[0]).astype(np.float32))
    return masks


# ----------------------------------------------------------------------------
# Pallas kernel: 3 fused matmuls + elementwise LSTM-type gating on one batch tile.
#   xc_ref : [TB, D+C]   (x || context)
#   w0c    : [D+C, H],  b0 : [1, H]
#   w1     : [H, H],    b1 : [1, H]
#   w2     : [H, 2D],   b2 : [1, 2D]  (sbias already folded into the s-half of b2)
#   out    : [TB, 2D]   (z || -log_sigmoid(s))
# ----------------------------------------------------------------------------
def iaf_kernel(xc_ref, w0c_ref, b0_ref, w1_ref, b1_ref, w2_ref, b2_ref, out_ref):
    D = out_ref.shape[-1] // 2

    xc = xc_ref[...]

    # Layer 0 (masked linear + context conditioning, fused into one matmul)
    h = jnp.dot(xc, w0c_ref[...], preferred_element_type=jnp.float32) + b0_ref[...]
    h = jnp.maximum(h, 0.0)

    # Layer 1
    h = jnp.dot(h, w1_ref[...], preferred_element_type=jnp.float32) + b1_ref[...]
    h = jnp.maximum(h, 0.0)

    # Layer 2: (m || s) in one matmul; sbias pre-folded into the bias.
    ms = jnp.dot(h, w2_ref[...], preferred_element_type=jnp.float32) + b2_ref[...]
    m = ms[:, :D]
    s = ms[:, D:]
    x = xc[:, :D]

    # LSTM-type update (Eq. 11-14 of 1606.04934), single shared exp:
    #   sigmoid(s)      = 1 / (1 + exp(-s))
    #   -log_sigmoid(s) = softplus(-s) = log1p(exp(-s))
    t = jnp.exp(-s)
    sig = 1.0 / (1.0 + t)
    z = m + sig * (x - m)          # == sig*x + (1-sig)*m
    nls = jnp.log1p(t)

    out_ref[...] = jnp.concatenate([z, nls], axis=-1)


# ----------------------------------------------------------------------------
# Wrapper: concat (x, ctx), run batch-gridded pallas_call with resident weights,
# split the lane-dense [B, 2D] output into (z, -log_sigmoid(s)).
# ----------------------------------------------------------------------------
def inverse_autoregressive_flow(x, context, params):
    B, D = x.shape
    C = context.shape[1]
    H = params["w0c"].shape[1]

    xc = jnp.concatenate([x, context], axis=-1)  # [B, D+C]

    # Batch tile: full batch for small B; cap at 512 rows (multiple of 8) for large B
    # so activation double-buffers stay well within the v7x 64 MiB VMEM budget.
    tb = B if B <= 512 else 512
    grid = (pl.cdiv(B, tb),)

    def act_spec(f):
        return pl.BlockSpec((tb, f), lambda i: (i, 0))

    def resident_spec(shape):
        return pl.BlockSpec(shape, lambda i: (0, 0))

    out = pl.pallas_call(
        iaf_kernel,
        out_shape=jax.ShapeDtypeStruct((B, 2 * D), jnp.float32),
        grid=grid,
        in_specs=[
            act_spec(D + C),                       # xc
            resident_spec((D + C, H)),             # w0c
            resident_spec((1, H)),                 # b0
            resident_spec((H, H)),                 # w1
            resident_spec((1, H)),                 # b1
            resident_spec((H, 2 * D)),             # w2
            resident_spec((1, 2 * D)),             # b2 (+ sbias)
        ],
        out_specs=act_spec(2 * D),
        compiler_params=pltpu.CompilerParams(
            dimension_semantics=("parallel",),
        ),
    )(xc, params["w0c"], params["b0"], params["w1"], params["b1"],
      params["w2"], params["b2"])

    return out[:, :D], out[:, D:]  # (z, -log_sigmoid(s))


def init_params(key, num_input, num_hidden, num_context):
    D, H, C = num_input, num_hidden, num_context
    degrees = create_degrees(D, [H, H])
    m0, m1, m2 = create_masks(degrees)            # (D,H), (H,H), (H,D)
    m2 = np.hstack([m2, m2])                      # (H, 2D), num_outputs_per_input=2
    # PyTorch stores Linear weights as (out, in); masks are registered as m.T to match.
    mask0 = jnp.asarray(m0.T)                     # (H, D)
    mask1 = jnp.asarray(m1.T)                     # (H, H)
    mask2 = jnp.asarray(m2.T)                     # (2D, H)

    def linear_init(key, out_f, in_f, bias=True):
        k1, k2 = jax.random.split(key)
        bound = 1.0 / np.sqrt(in_f)
        w = jax.random.uniform(k1, (out_f, in_f), jnp.float32, -bound, bound)
        b = jax.random.uniform(k2, (out_f,), jnp.float32, -bound, bound) if bias else None
        return w, b

    k0, kc, k1, k2 = jax.random.split(key, 4)
    W0, b0 = linear_init(k0, H, D)
    Wc, _ = linear_init(kc, H, C, bias=False)
    W1, b1 = linear_init(k1, H, H)
    W2, b2 = linear_init(k2, 2 * D, H)
    sigmoid_arg_bias = jnp.ones((D,), jnp.float32) * 2.0

    # Pre-mask, transpose to [in, out], and fuse:
    #   w0c = [ (mask0*W0)^T ; Wc^T ]  -> (D+C, H)
    #   w2  = (mask2*W2)^T             -> (H, 2D)
    #   b2  gets sigmoid_arg_bias folded into its s-half.
    w0c = jnp.concatenate([(mask0 * W0).T, Wc.T], axis=0)          # (D+C, H)
    w2 = (mask2 * W2).T                                            # (H, 2D)
    b2_fused = jnp.concatenate([b2[:D], b2[D:] + sigmoid_arg_bias])  # (2D,)

    return {
        "w0c": w0c,
        "b0": b0.reshape(1, H),
        "w1": (mask1 * W1).T,                      # (H, H)
        "b1": b1.reshape(1, H),
        "w2": w2,                                  # (H, 2D)
        "b2": b2_fused.reshape(1, 2 * D),
    }


def reference_forward(x, ctx, p):
    D = x.shape[1]
    xc = jnp.concatenate([x, ctx], axis=-1)
    h = jnp.maximum(xc @ p["w0c"] + p["b0"], 0.0)
    h = jnp.maximum(h @ p["w1"] + p["b1"], 0.0)
    ms = h @ p["w2"] + p["b2"]
    m, s = ms[:, :D], ms[:, D:]
    sig = jax.nn.sigmoid(s)
    return sig * x + (1.0 - sig) * m, jax.nn.softplus(-s)


if __name__ == "__main__":
    num_input, num_hidden, num_context, batch = 16, 32, 8, 8

    key = jax.random.PRNGKey(0)
    kp, kx, kc = jax.random.split(key, 3)
    params = init_params(kp, num_input, num_hidden, num_context)
    x = jax.random.normal(kx, (batch, num_input), jnp.float32)
    ctx = jax.random.normal(kc, (batch, num_context), jnp.float32)

    z, neg_log_sig = inverse_autoregressive_flow(x, ctx, params)
    z = jax.block_until_ready(z)
    neg_log_sig = jax.block_until_ready(neg_log_sig)

    z_ref, nls_ref = reference_forward(x, ctx, params)
    np.testing.assert_allclose(np.asarray(z), np.asarray(z_ref), rtol=1e-5, atol=1e-5)
    np.testing.assert_allclose(np.asarray(neg_log_sig), np.asarray(nls_ref), rtol=1e-5, atol=1e-5)

    print("KERNEL_OK")
</pallas_src>

<mosaic_0001>
module attributes {stable_mosaic.version = 11 : i64} {
  func.func @iaf_kernel(%arg0: i32, %arg1: memref<8x24xf32, #tpu.memory_space<vmem>>, %arg2: memref<24x32xf32, #tpu.memory_space<vmem>>, %arg3: memref<1x32xf32, #tpu.memory_space<vmem>>, %arg4: memref<32x32xf32, #tpu.memory_space<vmem>>, %arg5: memref<1x32xf32, #tpu.memory_space<vmem>>, %arg6: memref<32x32xf32, #tpu.memory_space<vmem>>, %arg7: memref<1x32xf32, #tpu.memory_space<vmem>>, %arg8: memref<8x32xf32, #tpu.memory_space<vmem>>) attributes {dimension_semantics = [#tpu.dimension_semantics<parallel>], iteration_bounds = array<i64: 1>, scalar_prefetch = 0 : i64, scratch_operands = 0 : i64, tpu.core_type = #tpu.core_type<tc>, window_params = [{transform_indices = @transform_0, window_bounds = array<i64: 8, 24>}, {pipeline_mode = #tpu.pipeline_mode<synchronous>, transform_indices = @transform_1, window_bounds = array<i64: 24, 32>}, {pipeline_mode = #tpu.pipeline_mode<synchronous>, transform_indices = @transform_2, window_bounds = array<i64: 1, 32>}, {pipeline_mode = #tpu.pipeline_mode<synchronous>, transform_indices = @transform_3, window_bounds = array<i64: 32, 32>}, {pipeline_mode = #tpu.pipeline_mode<synchronous>, transform_indices = @transform_4, window_bounds = array<i64: 1, 32>}, {pipeline_mode = #tpu.pipeline_mode<synchronous>, transform_indices = @transform_5, window_bounds = array<i64: 32, 32>}, {pipeline_mode = #tpu.pipeline_mode<synchronous>, transform_indices = @transform_6, window_bounds = array<i64: 1, 32>}, {transform_indices = @transform_7, window_bounds = array<i64: 8, 32>}]} {
    %c0 = arith.constant 0 : index
    %c0_0 = arith.constant 0 : index
    %0 = vector.load %arg1[%c0, %c0_0] : memref<8x24xf32, #tpu.memory_space<vmem>>, vector<8x24xf32>
    %c0_1 = arith.constant 0 : index
    %c0_2 = arith.constant 0 : index
    %1 = vector.load %arg2[%c0_1, %c0_2] : memref<24x32xf32, #tpu.memory_space<vmem>>, vector<24x32xf32>
    %cst = arith.constant dense<0.000000e+00> : vector<8x32xf32>
    %2 = tpu.matmul %0, %1, %cst {dimension_numbers = #tpu.dot_dimension_numbers<[1], [0], [0], [1], [0, 0, 1, 1], [], []>} : vector<8x24xf32>, vector<24x32xf32>, vector<8x32xf32> -> vector<8x32xf32>
    %c0_3 = arith.constant 0 : index
    %c0_4 = arith.constant 0 : index
    %3 = vector.load %arg3[%c0_3, %c0_4] : memref<1x32xf32, #tpu.memory_space<vmem>>, vector<1x32xf32>
    %4 = vector.broadcast %3 : vector<1x32xf32> to vector<8x32xf32>
    %5 = arith.addf %2, %4 : vector<8x32xf32>
    %cst_5 = arith.constant 0.000000e+00 : f32
    %6 = vector.broadcast %cst_5 : f32 to vector<8x32xf32>
    %7 = arith.maximumf %5, %6 : vector<8x32xf32>
    %c0_6 = arith.constant 0 : index
    %c0_7 = arith.constant 0 : index
    %8 = vector.load %arg4[%c0_6, %c0_7] : memref<32x32xf32, #tpu.memory_space<vmem>>, vector<32x32xf32>
    %cst_8 = arith.constant dense<0.000000e+00> : vector<8x32xf32>
    %9 = tpu.matmul %7, %8, %cst_8 {dimension_numbers = #tpu.dot_dimension_numbers<[1], [0], [0], [1], [0, 0, 1, 1], [], []>} : vector<8x32xf32>, vector<32x32xf32>, vector<8x32xf32> -> vector<8x32xf32>
    %c0_9 = arith.constant 0 : index
    %c0_10 = arith.constant 0 : index
    %10 = vector.load %arg5[%c0_9, %c0_10] : memref<1x32xf32, #tpu.memory_space<vmem>>, vector<1x32xf32>
    %11 = vector.broadcast %10 : vector<1x32xf32> to vector<8x32xf32>
    %12 = arith.addf %9, %11 : vector<8x32xf32>
    %cst_11 = arith.constant 0.000000e+00 : f32
    %13 = vector.broadcast %cst_11 : f32 to vector<8x32xf32>
    %14 = arith.maximumf %12, %13 : vector<8x32xf32>
    %c0_12 = arith.constant 0 : index
    %c0_13 = arith.constant 0 : index
    %15 = vector.load %arg6[%c0_12, %c0_13] : memref<32x32xf32, #tpu.memory_space<vmem>>, vector<32x32xf32>
    %cst_14 = arith.constant dense<0.000000e+00> : vector<8x32xf32>
    %16 = tpu.matmul %14, %15, %cst_14 {dimension_numbers = #tpu.dot_dimension_numbers<[1], [0], [0], [1], [0, 0, 1, 1], [], []>} : vector<8x32xf32>, vector<32x32xf32>, vector<8x32xf32> -> vector<8x32xf32>
    %c0_15 = arith.constant 0 : index
    %c0_16 = arith.constant 0 : index
    %17 = vector.load %arg7[%c0_15, %c0_16] : memref<1x32xf32, #tpu.memory_space<vmem>>, vector<1x32xf32>
    %18 = vector.broadcast %17 : vector<1x32xf32> to vector<8x32xf32>
    %19 = arith.addf %16, %18 : vector<8x32xf32>
    %20 = vector.extract_strided_slice %19 {offsets = [0, 0], sizes = [8, 16], strides = [1, 1]} : vector<8x32xf32> to vector<8x16xf32>
    %21 = vector.extract_strided_slice %19 {offsets = [0, 16], sizes = [8, 16], strides = [1, 1]} : vector<8x32xf32> to vector<8x16xf32>
    %22 = vector.extract_strided_slice %0 {offsets = [0, 0], sizes = [8, 16], strides = [1, 1]} : vector<8x24xf32> to vector<8x16xf32>
    %cst_17 = arith.constant 0.000000e+00 : f32
    %23 = vector.broadcast %cst_17 : f32 to vector<8x16xf32>
    %24 = arith.subf %23, %21 : vector<8x16xf32>
    %25 = math.exp %24 : vector<8x16xf32>
    %cst_18 = arith.constant 1.000000e+00 : f32
    %26 = vector.broadcast %cst_18 : f32 to vector<8x16xf32>
    %27 = arith.addf %26, %25 : vector<8x16xf32>
    %cst_19 = arith.constant 1.000000e+00 : f32
    %28 = vector.broadcast %cst_19 : f32 to vector<8x16xf32>
    %29 = arith.divf %28, %27 : vector<8x16xf32>
    %30 = arith.subf %22, %20 : vector<8x16xf32>
    %31 = arith.mulf %29, %30 : vector<8x16xf32>
    %32 = arith.addf %20, %31 : vector<8x16xf32>
    %33 = math.log1p %25 : vector<8x16xf32>
    %34 = tpu.concatenate %32, %33 in 1 : vector<8x16xf32>, vector<8x16xf32> -> vector<8x32xf32>
    %c0_20 = arith.constant 0 : index
    %c0_21 = arith.constant 0 : index
    %35 = vector.load %arg8[%c0_20, %c0_21] : memref<8x32xf32, #tpu.memory_space<vmem>>, vector<8x32xf32>
    tpu.vector_store %arg8[%c0_20, %c0_21], %34 {strides = array<i32>} : memref<8x32xf32, #tpu.memory_space<vmem>>, vector<8x32xf32>,
    return
  }
  func.func @transform_0(%arg0: i32) -> (i32, i32) {
    %c0_i32 = arith.constant 0 : i32
    %c0_i32_0 = arith.constant 0 : i32
    return %arg0, %c0_i32 : i32, i32
  }
  func.func @transform_1(%arg0: i32) -> (i32, i32) {
    %c0_i32 = arith.constant 0 : i32
    %c0_i32_0 = arith.constant 0 : i32
    %c0_i32_1 = arith.constant 0 : i32
    return %c0_i32, %c0_i32_0 : i32, i32
  }
  func.func @transform_2(%arg0: i32) -> (i32, i32) {
    %c0_i32 = arith.constant 0 : i32
    %c0_i32_0 = arith.constant 0 : i32
    %c0_i32_1 = arith.constant 0 : i32
    return %c0_i32, %c0_i32_0 : i32, i32
  }
  func.func @transform_3(%arg0: i32) -> (i32, i32) {
    %c0_i32 = arith.constant 0 : i32
    %c0_i32_0 = arith.constant 0 : i32
    %c0_i32_1 = arith.constant 0 : i32
    return %c0_i32, %c0_i32_0 : i32, i32
  }
  func.func @transform_4(%arg0: i32) -> (i32, i32) {
    %c0_i32 = arith.constant 0 : i32
    %c0_i32_0 = arith.constant 0 : i32
    %c0_i32_1 = arith.constant 0 : i32
    return %c0_i32, %c0_i32_0 : i32, i32
  }
  func.func @transform_5(%arg0: i32) -> (i32, i32) {
    %c0_i32 = arith.constant 0 : i32
    %c0_i32_0 = arith.constant 0 : i32
    %c0_i32_1 = arith.constant 0 : i32
    return %c0_i32, %c0_i32_0 : i32, i32
  }
  func.func @transform_6(%arg0: i32) -> (i32, i32) {
    %c0_i32 = arith.constant 0 : i32
    %c0_i32_0 = arith.constant 0 : i32
    %c0_i32_1 = arith.constant 0 : i32
    return %c0_i32, %c0_i32_0 : i32, i32
  }
  func.func @transform_7(%arg0: i32) -> (i32, i32) {
    %c0_i32 = arith.constant 0 : i32
    %c0_i32_0 = arith.constant 0 : i32
    return %arg0, %c0_i32 : i32, i32
  }
}

</mosaic_0001>

<llo_original>
// kernel: tpu_custom_call.1
$region0: #{tpu_custom_call.1}
  #allocation0 [shape = 'u32[]', space=smem, size = 0x4, offset = 0x4, fixed_abs, tag = 'smem constant byte address 0x4 - core index']
  #allocation1 [shape = 'u32[144,128]{1,0:T(1,128)}', space=vmem, size = 0x12000, scoped, tag = 'internal scratch']
  %s0 = inlined_call_operand.hbm [shape: f32[8,24], index: 0, kind: input, shape index: {}]
  %s1 = inlined_call_operand.hbm [shape: f32[24,32], index: 1, kind: input, shape index: {}]
  %s2 = inlined_call_operand.vmem [shape: f32[1,32], index: 2, kind: input, shape index: {}]
  %s3 = inlined_call_operand.hbm [shape: f32[32,32], index: 3, kind: input, shape index: {}]
  %s4 = inlined_call_operand.vmem [shape: f32[1,32], index: 4, kind: input, shape index: {}]
  %s5 = inlined_call_operand.hbm [shape: f32[32,32], index: 5, kind: input, shape index: {}]
  %s6 = inlined_call_operand.vmem [shape: f32[1,32], index: 6, kind: input, shape index: {}]
  %s7 = inlined_call_operand.hbm [shape: f32[8,32], index: 7, kind: output, shape index: {}]
  %s8 = sld [smem:[#allocation0]]
  $region54: #{tpu_custom_call.1} parent=0
    _
  %s10 = ssub.s32 1, %s8
  %s11 = scalar_select 0, %s10, %s8
  $region1: #{tpu_custom_call.1} parent=0
    #allocation2 [shape = 'u8[4096]{0}', space=vmem, size = 0x1000, scoped, tag = 'input window, operand 0, single buffered']
    #allocation3 [shape = 's32[1]{0}', space=sflag, size = 0x4, scoped, tag = 'scoped memory for tpu_custom_call.1']
    #allocation4 [shape = 's32[1]{0}', space=sflag, size = 0x4, scoped, tag = 'scoped memory for tpu_custom_call.1']
    #allocation5 [shape = 'u8[12288]{0}', space=vmem, size = 0x3000, scoped, tag = 'input window, operand 1, single buffered']
    #allocation6 [shape = 's32[1]{0}', space=sflag, size = 0x4, scoped, tag = 'scoped memory for tpu_custom_call.1']
    #allocation7 [shape = 'u8[16384]{0}', space=vmem, size = 0x4000, scoped, tag = 'input window, operand 3, single buffered']
    #allocation8 [shape = 'u8[16384]{0}', space=vmem, size = 0x4000, scoped, tag = 'input window, operand 5, single buffered']
    #allocation9 [shape = 's32[1]{0}', space=sflag, size = 0x4, scoped, tag = 'scoped memory for tpu_custom_call.1']
    #allocation10 [shape = 'u8[4096]{0}', space=vmem, size = 0x1000, scoped, tag = 'output window, operand 0, single buffered']
    %12 = vsyncpa [#allocation3], 0
    %13 = vsyncpa [#allocation6], 0
    %14 = vsyncpa [#allocation9], 0
    %15 = vsyncpa [#allocation4], 0
    // Predicated region
    $region2: #{tpu_custom_call.1} parent=1 // pred_check
      _
    $region3: #{tpu_custom_call.1} parent=1 // pred_check_branch
      %17 = sbr.rel (0) target = $region5
    $region4: #{tpu_custom_call.1} parent=1 // pred_region
      %s19 = ssub.s32 128, 128
      %20 = vsyncadd [#allocation3], %s19
      %s22 = sshll.u32 [#allocation2], 4
      %s23 = int_to_ptr.vmem [resolvable:$true] %s22
      %25 = dma.hbm_to_vmem [thread:$0]  %s0, 128, %s23, [#allocation3]
    $region5: #{tpu_custom_call.1} parent=1 // pred_fallthru
      _
    // Predicated region
    $region6: #{tpu_custom_call.1} parent=1 // pred_check
      _
    $region7: #{tpu_custom_call.1} parent=1 // pred_check_branch
      %27 = sbr.rel (0) target = $region9
    $region8: #{tpu_custom_call.1} parent=1 // pred_region
      %s29 = ssub.s32 384, 384
      %30 = vsyncadd [#allocation6], %s29
      %s31 = sshll.u32 [#allocation5], 4
      %s32 = int_to_ptr.vmem [resolvable:$true] %s31
      %37 = dma.hbm_to_vmem [thread:$0]  %s1, 384, %s32, [#allocation6], 128, 128, 8
    $region9: #{tpu_custom_call.1} parent=1 // pred_fallthru
      _
    // Predicated region
    $region10: #{tpu_custom_call.1} parent=1 // pred_check
      _
    $region11: #{tpu_custom_call.1} parent=1 // pred_check_branch
      %39 = sbr.rel (0) target = $region13
    $region12: #{tpu_custom_call.1} parent=1 // pred_region
      _
    $region13: #{tpu_custom_call.1} parent=1 // pred_fallthru
      _
    // Predicated region
    $region14: #{tpu_custom_call.1} parent=1 // pred_check
      _
    $region15: #{tpu_custom_call.1} parent=1 // pred_check_branch
      %41 = sbr.rel (0) target = $region17
    $region16: #{tpu_custom_call.1} parent=1 // pred_region
      %s43 = ssub.s32 512, 512
      %44 = vsyncadd [#allocation6], %s43
      %s45 = sshll.u32 [#allocation7], 4
      %s46 = int_to_ptr.vmem [resolvable:$true] %s45
      %51 = dma.hbm_to_vmem [thread:$0]  %s3, 512, %s46, [#allocation6], 128, 128, 8
    $region17: #{tpu_custom_call.1} parent=1 // pred_fallthru
      _
    // Predicated region
    $region18: #{tpu_custom_call.1} parent=1 // pred_check
      _
    $region19: #{tpu_custom_call.1} parent=1 // pred_check_branch
      %53 = sbr.rel (0) target = $region21
    $region20: #{tpu_custom_call.1} parent=1 // pred_region
      _
    $region21: #{tpu_custom_call.1} parent=1 // pred_fallthru
      _
    // Predicated region
    $region22: #{tpu_custom_call.1} parent=1 // pred_check
      _
    $region23: #{tpu_custom_call.1} parent=1 // pred_check_branch
      %55 = sbr.rel (0) target = $region25
    $region24: #{tpu_custom_call.1} parent=1 // pred_region
      %s57 = ssub.s32 512, 512
      %58 = vsyncadd [#allocation9], %s57
      %s59 = sshll.u32 [#allocation8], 4
      %s60 = int_to_ptr.vmem [resolvable:$true] %s59
      %65 = dma.hbm_to_vmem [thread:$0]  %s5, 512, %s60, [#allocation9], 128, 128, 8
    $region25: #{tpu_custom_call.1} parent=1 // pred_fallthru
      _
    // Predicated region
    $region26: #{tpu_custom_call.1} parent=1 // pred_check
      _
    $region27: #{tpu_custom_call.1} parent=1 // pred_check_branch
      %67 = sbr.rel (0) target = $region29
    $region28: #{tpu_custom_call.1} parent=1 // pred_region
      _
    $region29: #{tpu_custom_call.1} parent=1 // pred_fallthru
      _
    // Predicated region
    $region30: #{tpu_custom_call.1} parent=1 // pred_check
      _
    $region31: #{tpu_custom_call.1} parent=1 // pred_check_branch
      %69 = sbr.rel (0) target = $region33
    $region32: #{tpu_custom_call.1} parent=1 // pred_region
      %70 = dma.done [#allocation3], 128
    $region33: #{tpu_custom_call.1} parent=1 // pred_fallthru
      _
    // Predicated region
    $region34: #{tpu_custom_call.1} parent=1 // pred_check
      _
    $region35: #{tpu_custom_call.1} parent=1 // pred_check_branch
      %72 = sbr.rel (0) target = $region37
    $region36: #{tpu_custom_call.1} parent=1 // pred_region
      %73 = dma.done [#allocation6], 384
    $region37: #{tpu_custom_call.1} parent=1 // pred_fallthru
      _
    // Predicated region
    $region38: #{tpu_custom_call.1} parent=1 // pred_check
      _
    $region39: #{tpu_custom_call.1} parent=1 // pred_check_branch
      %75 = sbr.rel (0) target = $region41
    $region40: #{tpu_custom_call.1} parent=1 // pred_region
      %76 = dma.done [#allocation6], 512
    $region41: #{tpu_custom_call.1} parent=1 // pred_fallthru
      _
    // Predicated region
    $region42: #{tpu_custom_call.1} parent=1 // pred_check
      _
    $region43: #{tpu_custom_call.1} parent=1 // pred_check_branch
      %78 = sbr.rel (0) target = $region45
    $region44: #{tpu_custom_call.1} parent=1 // pred_region
      %79 = dma.done [#allocation9], 512
    $region45: #{tpu_custom_call.1} parent=1 // pred_fallthru
      _
    %v80 = vld [vmem:[#allocation2] sm:$0xff]
    %v81 = vld [vmem:[#allocation5] sm:$0xff]
    %v82 = vld [vmem:[#allocation5 + $0x8] sm:$0xff]
    %v83 = vld [vmem:[#allocation5 + $0x10] sm:$0xff]
    %v84 = vld [vmem:[%s2] sm:$0x1]
    %v86 = vlaneseq
    %v87 = vshrl.u32 %v86, 7
    %v88 = vsub.s32 0, %v87
    %v89 = vrot.slane %v84, %v88
    %vm91 = vcmask 195584
    %v93 = vsel %vm91, %v80, 0
    %95 = vmatprep.subr.mxu0 0.0
    %96 = vmatpush1.msra.mxu0 %v81
    %97 = vmatprep.subr.mxu0 0.0
    %98 = vmatpush1.msra.mxu0 %v82
    %99 = vmatprep.subr.mxu0 0.0
    %100 = vmatpush1.msra.mxu0 %v83
    %101 = vmatprep.subr.mxu0 0.0
    %102 = vmatpush1.msra.mxu0 0.0
    %103 = vmatprep.subr.mxu0 0.0
    %104 = vmatpush1.msra.mxu0 0.0
    %105 = vmatprep.subr.mxu0 0.0
    %106 = vmatpush1.msra.mxu0 0.0
    %107 = vmatprep.subr.mxu0 0.0
    %108 = vmatpush1.msra.mxu0 0.0
    %109 = vmatprep.subr.mxu0 0.0
    %110 = vmatpush1.msra.mxu0 0.0
    %111 = vmatprep.subr.mxu0 0.0
    %112 = vmatpush1.msra.mxu0 0.0
    %113 = vmatprep.subr.mxu0 0.0
    %114 = vmatpush1.msra.mxu0 0.0
    %115 = vmatprep.subr.mxu0 0.0
    %116 = vmatpush1.msra.mxu0 0.0
    %117 = vmatprep.subr.mxu0 0.0
    %118 = vmatpush1.msra.mxu0 0.0
    %119 = vmatprep.subr.mxu0 0.0
    %120 = vmatpush1.msra.mxu0 0.0
    %121 = vmatprep.subr.mxu0 0.0
    %122 = vmatpush1.msra.mxu0 0.0
    %123 = vmatprep.subr.mxu0 0.0
    %124 = vmatpush1.msra.mxu0 0.0
    %125 = vmatprep.subr.mxu0 0.0
    %126 = vmatpush1.msra.mxu0 0.0
    %127 = vmatprep.subr.mxu0 0.0
    %128 = vmatpush1.msra.mxu0 0.0
    %129 = vmatprep.subr.mxu0 0.0
    %130 = vmatpush1.msra.mxu0 0.0
    %131 = vmatprep.subr.mxu0 0.0
    %132 = vmatpush1.msra.mxu0 0.0
    %133 = vmatprep.subr.mxu0 0.0
    %134 = vmatpush1.msra.mxu0 0.0
    %135 = vmatprep.subr.mxu0 0.0
    %136 = vmatpush1.msra.mxu0 0.0
    %137 = vmatprep.subr.mxu0 0.0
    %138 = vmatpush1.msra.mxu0 0.0
    %139 = vmatprep.subr.mxu0 0.0
    %140 = vmatpush1.msra.mxu0 0.0
    %141 = vmatprep.subr.mxu0 0.0
    %142 = vmatpush1.msra.mxu0 0.0
    %143 = vmatprep.subr.mxu0 0.0
    %144 = vmatpush1.msra.mxu0 0.0
    %145 = vmatprep.subr.mxu0 0.0
    %146 = vmatpush1.msra.mxu0 0.0
    %147 = vmatprep.subr.mxu0 0.0
    %148 = vmatpush1.msra.mxu0 0.0
    %149 = vmatprep.subr.mxu0 0.0
    %150 = vmatpush1.msra.mxu0 0.0
    %151 = vmatprep.subr.mxu0 0.0
    %152 = vmatpush1.msra.mxu0 0.0
    %153 = vmatprep.subr.mxu0 0.0
    %154 = vmatpush1.msra.mxu0 0.0
    %155 = vmatprep.subr.mxu0 0.0
    %156 = vmatpush1.msra.mxu0 0.0
    %157 = vmatprep.subr.mxu0 0.0
    %158 = vmatpush1.msra.mxu0 0.0
    %159 = vmatprep.mubr.f32.mxu0 0.0
    %160 = vmatmul.mubr.f32.gmra.mrb[0].mxu0 %v93
    %v161 = vpop.f32.mrb[0].mxu0
    %v162 = vadd.f32 %v89, %v161
    %v163 = vpop.f32.mrb[0].mxu0
    %164 = vdwg.mxu0
    %v165 = vmax.f32 %v162, 0.0
    %v166 = vld [vmem:[#allocation7] sm:$0xff]
    %v167 = vld [vmem:[#allocation7 + $0x8] sm:$0xff]
    %v168 = vld [vmem:[#allocation7 + $0x10] sm:$0xff]
    %v169 = vld [vmem:[#allocation7 + $0x18] sm:$0xff]
    %v170 = vld [vmem:[%s4] sm:$0x1]
    %v172 = vlaneseq
    %v173 = vshrl.u32 %v172, 7
    %v174 = vsub.s32 0, %v173
    %v175 = vrot.slane %v170, %v174
    %vm177 = vcmask 261120
    %v179 = vsel %vm177, %v165, 0
    %181 = vmatprep.subr.mxu0 0.0
    %182 = vmatpush1.msra.mxu0 %v166
    %183 = vmatprep.subr.mxu0 0.0
    %184 = vmatpush1.msra.mxu0 %v167
    %185 = vmatprep.subr.mxu0 0.0
    %186 = vmatpush1.msra.mxu0 %v168
    %187 = vmatprep.subr.mxu0 0.0
    %188 = vmatpush1.msra.mxu0 %v169
    %189 = vmatprep.subr.mxu0 0.0
    %190 = vmatpush1.msra.mxu0 0.0
    %191 = vmatprep.subr.mxu0 0.0
    %192 = vmatpush1.msra.mxu0 0.0
    %193 = vmatprep.subr.mxu0 0.0
    %194 = vmatpush1.msra.mxu0 0.0
    %195 = vmatprep.subr.mxu0 0.0
    %196 = vmatpush1.msra.mxu0 0.0
    %197 = vmatprep.subr.mxu0 0.0
    %198 = vmatpush1.msra.mxu0 0.0
    %199 = vmatprep.subr.mxu0 0.0
    %200 = vmatpush1.msra.mxu0 0.0
    %201 = vmatprep.subr.mxu0 0.0
    %202 = vmatpush1.msra.mxu0 0.0
    %203 = vmatprep.subr.mxu0 0.0
    %204 = vmatpush1.msra.mxu0 0.0
    %205 = vmatprep.subr.mxu0 0.0
    %206 = vmatpush1.msra.mxu0 0.0
    %207 = vmatprep.subr.mxu0 0.0
    %208 = vmatpush1.msra.mxu0 0.0
    %209 = vmatprep.subr.mxu0 0.0
    %210 = vmatpush1.msra.mxu0 0.0
    %211 = vmatprep.subr.mxu0 0.0
    %212 = vmatpush1.msra.mxu0 0.0
    %213 = vmatprep.subr.mxu0 0.0
    %214 = vmatpush1.msra.mxu0 0.0
    %215 = vmatprep.subr.mxu0 0.0
    %216 = vmatpush1.msra.mxu0 0.0
    %217 = vmatprep.subr.mxu0 0.0
    %218 = vmatpush1.msra.mxu0 0.0
    %219 = vmatprep.subr.mxu0 0.0
    %220 = vmatpush1.msra.mxu0 0.0
    %221 = vmatprep.subr.mxu0 0.0
    %222 = vmatpush1.msra.mxu0 0.0
    %223 = vmatprep.subr.mxu0 0.0
    %224 = vmatpush1.msra.mxu0 0.0
    %225 = vmatprep.subr.mxu0 0.0
    %226 = vmatpush1.msra.mxu0 0.0
    %227 = vmatprep.subr.mxu0 0.0
    %228 = vmatpush1.msra.mxu0 0.0
    %229 = vmatprep.subr.mxu0 0.0
    %230 = vmatpush1.msra.mxu0 0.0
    %231 = vmatprep.subr.mxu0 0.0
    %232 = vmatpush1.msra.mxu0 0.0
    %233 = vmatprep.subr.mxu0 0.0
    %234 = vmatpush1.msra.mxu0 0.0
    %235 = vmatprep.subr.mxu0 0.0
    %236 = vmatpush1.msra.mxu0 0.0
    %237 = vmatprep.subr.mxu0 0.0
    %238 = vmatpush1.msra.mxu0 0.0
    %239 = vmatprep.subr.mxu0 0.0
    %240 = vmatpush1.msra.mxu0 0.0
    %241 = vmatprep.subr.mxu0 0.0
    %242 = vmatpush1.msra.mxu0 0.0
    %243 = vmatprep.subr.mxu0 0.0
    %244 = vmatpush1.msra.mxu0 0.0
    %245 = vmatprep.mubr.f32.mxu0 0.0
    %246 = vmatmul.mubr.f32.gmra.mrb[0].mxu0 %v179
    %v247 = vpop.f32.mrb[0].mxu0
    %v248 = vadd.f32 %v175, %v247
    %v249 = vpop.f32.mrb[0].mxu0
    %250 = vdwg.mxu0
    %v251 = vmax.f32 %v248, 0.0
    %v252 = vld [vmem:[#allocation8] sm:$0xff]
    %v253 = vld [vmem:[#allocation8 + $0x8] sm:$0xff]
    %v254 = vld [vmem:[#allocation8 + $0x10] sm:$0xff]
    %v255 = vld [vmem:[#allocation8 + $0x18] sm:$0xff]
    %v256 = vld [vmem:[%s6] sm:$0x1]
    %v258 = vlaneseq
    %v259 = vshrl.u32 %v258, 7
    %v260 = vsub.s32 0, %v259
    %v261 = vrot.slane %v256, %v260
    %v264 = vsel %vm177, %v251, 0
    %266 = vmatprep.subr.mxu0 0.0
    %267 = vmatpush1.msra.mxu0 %v252
    %268 = vmatprep.subr.mxu0 0.0
    %269 = vmatpush1.msra.mxu0 %v253
    %270 = vmatprep.subr.mxu0 0.0
    %271 = vmatpush1.msra.mxu0 %v254
    %272 = vmatprep.subr.mxu0 0.0
    %273 = vmatpush1.msra.mxu0 %v255
    %274 = vmatprep.subr.mxu0 0.0
    %275 = vmatpush1.msra.mxu0 0.0
    %276 = vmatprep.subr.mxu0 0.0
    %277 = vmatpush1.msra.mxu0 0.0
    %278 = vmatprep.subr.mxu0 0.0
    %279 = vmatpush1.msra.mxu0 0.0
    %280 = vmatprep.subr.mxu0 0.0
    %281 = vmatpush1.msra.mxu0 0.0
    %282 = vmatprep.subr.mxu0 0.0
    %283 = vmatpush1.msra.mxu0 0.0
    %284 = vmatprep.subr.mxu0 0.0
    %285 = vmatpush1.msra.mxu0 0.0
    %286 = vmatprep.subr.mxu0 0.0
    %287 = vmatpush1.msra.mxu0 0.0
    %288 = vmatprep.subr.mxu0 0.0
    %289 = vmatpush1.msra.mxu0 0.0
    %290 = vmatprep.subr.mxu0 0.0
    %291 = vmatpush1.msra.mxu0 0.0
    %292 = vmatprep.subr.mxu0 0.0
    %293 = vmatpush1.msra.mxu0 0.0
    %294 = vmatprep.subr.mxu0 0.0
    %295 = vmatpush1.msra.mxu0 0.0
    %296 = vmatprep.subr.mxu0 0.0
    %297 = vmatpush1.msra.mxu0 0.0
    %298 = vmatprep.subr.mxu0 0.0
    %299 = vmatpush1.msra.mxu0 0.0
    %300 = vmatprep.subr.mxu0 0.0
    %301 = vmatpush1.msra.mxu0 0.0
    %302 = vmatprep.subr.mxu0 0.0
    %303 = vmatpush1.msra.mxu0 0.0
    %304 = vmatprep.subr.mxu0 0.0
    %305 = vmatpush1.msra.mxu0 0.0
    %306 = vmatprep.subr.mxu0 0.0
    %307 = vmatpush1.msra.mxu0 0.0
    %308 = vmatprep.subr.mxu0 0.0
    %309 = vmatpush1.msra.mxu0 0.0
    %310 = vmatprep.subr.mxu0 0.0
    %311 = vmatpush1.msra.mxu0 0.0
    %312 = vmatprep.subr.mxu0 0.0
    %313 = vmatpush1.msra.mxu0 0.0
    %314 = vmatprep.subr.mxu0 0.0
    %315 = vmatpush1.msra.mxu0 0.0
    %316 = vmatprep.subr.mxu0 0.0
    %317 = vmatpush1.msra.mxu0 0.0
    %318 = vmatprep.subr.mxu0 0.0
    %319 = vmatpush1.msra.mxu0 0.0
    %320 = vmatprep.subr.mxu0 0.0
    %321 = vmatpush1.msra.mxu0 0.0
    %322 = vmatprep.subr.mxu0 0.0
    %323 = vmatpush1.msra.mxu0 0.0
    %324 = vmatprep.subr.mxu0 0.0
    %325 = vmatpush1.msra.mxu0 0.0
    %326 = vmatprep.subr.mxu0 0.0
    %327 = vmatpush1.msra.mxu0 0.0
    %328 = vmatprep.subr.mxu0 0.0
    %329 = vmatpush1.msra.mxu0 0.0
    %330 = vmatprep.mubr.f32.mxu0 0.0
    %331 = vmatmul.mubr.f32.gmra.mrb[0].mxu0 %v264
    %v332 = vpop.f32.mrb[0].mxu0
    %v333 = vadd.f32 %v261, %v332
    %v334 = vpop.f32.mrb[0].mxu0
    %335 = vdwg.mxu0
    %v336 = vsub.f32 0.0, %v333
    %v337 = vmul.f32 %v336, 1.442695
    %v338 = vpow.pop %v337
    %v339 = vadd.f32 %v338, 1.0
    %v340 = vrcp.pop %v339
    %v341 = vmul.f32 1.0, %v340
    %v342 = vsub.f32 %v80, %v333
    %344 = vrot.lane.b32.xlu0 %v342, 16
    %v345 = vpop.permute.xlu0 %344
    %v347 = vmul.f32 %v341, %v345
    %349 = vrot.lane.b32.xlu0 %v347, 112
    %v350 = vpop.permute.xlu0 %349
    %v352 = vadd.f32 %v333, %v350
    %v353 = vadd.f32 %v338, 1.0
    %v354 = vlog2.pop %v353
    %v355 = vmul.f32 %v354, 0.6931472
    %v356 = vmul.f32 -0.5, %v338
    %v357 = vadd.f32 %v356, 1.0
    %v358 = vmul.f32 %v357, %v338
    %v359 = vand.u32 2147483647, %v338
    %vm360 = vcmp.lt.f32.partialorder %v359, 0.0004427343
    %v361 = vsel %vm360, %v358, %v355
    %vm362 = vcmask 130048
    %v363 = vsel %vm362, %v352, %v361
    %364 = vst.msk [vmem:[#allocation10] sm:$0xff] %vm177, %v363
    // Predicated region
    $region46: #{tpu_custom_call.1} parent=1 // pred_check
      _
    $region47: #{tpu_custom_call.1} parent=1 // pred_check_branch
      %366 = sbr.rel (0) target = $region49
    $region48: #{tpu_custom_call.1} parent=1 // pred_region
      %s368 = ssub.s32 128, 128
      %369 = vsyncadd [#allocation4], %s368
      %s371 = sshll.u32 [#allocation10], 4
      %s372 = int_to_ptr.vmem [resolvable:$true] %s371
      %374 = dma.vmem_to_hbm [thread:$0]  %s372, 128, %s7, [#allocation4]
    $region49: #{tpu_custom_call.1} parent=1 // pred_fallthru
      _
    // Predicated region
    $region50: #{tpu_custom_call.1} parent=1 // pred_check
      _
    $region51: #{tpu_custom_call.1} parent=1 // pred_check_branch
      %376 = sbr.rel (0) target = $region53
    $region52: #{tpu_custom_call.1} parent=1 // pred_region
      %377 = dma.done [#allocation4], 128
    $region53: #{tpu_custom_call.1} parent=1 // pred_fallthru
      _
    %378 = vsyncpa [#allocation3], 1
    %379 = vsyncpa [#allocation6], 1
    %380 = vsyncpa [#allocation9], 1
    %381 = vsyncpa [#allocation4], 1

</llo_original>
